<compile_context>
chip_gen: v7x
topology: tpu7x:2x2x1
jax: 0.10.0
libtpu: 0.0.40
codegen_flags: <defaults>
</compile_context>

<pallas_src>
import functools

import jax
import jax.numpy as jnp
from jax.experimental import pallas as pl
from jax.experimental.pallas import tpu as pltpu

FEAT = 64          # feature_vec_size
G = 8              # RBF grid points for the KAN layer
GRID_MIN, GRID_MAX = -2.0, 2.0
INV_DENOM = (G - 1) / (GRID_MAX - GRID_MIN)        # 1 / grid spacing
# Compile-time grid centers (already scaled by INV_DENOM for the kernel).
_GRID_SCALED = tuple(
    (GRID_MIN + k * (GRID_MAX - GRID_MIN) / (G - 1)) * INV_DENOM for k in range(G)
)
OUT_TRUE = 2       # real output width of the final Linear(32, 2)
OUT_PAD = 128      # lane-dense padded output width
KAN_K = FEAT * (G + 1)   # 576: [ SiLU(h) | phi_0 | ... | phi_7 ]
KAN_K0 = 256             # first K-chunk: SiLU + phi_0..2


def _pkan_kernel(x_ref,
                 w1_ref, b1_ref,
                 w2_ref, b2_ref,
                 w3_ref, b3_ref,
                 kanw_ref,
                 w4_ref, b4_ref,
                 w5_ref, b5_ref,
                 o_ref,
                 kan_in_ref):
    f32 = jnp.float32
    bf16 = jnp.bfloat16

    # Hoist bias loads (JAX does not CSE broadcast_in_dim).
    b1 = b1_ref[...]
    b2 = b2_ref[...]
    b3 = b3_ref[...]
    b4 = b4_ref[...]
    b5 = b5_ref[...]

    x = x_ref[...]                              # bf16 (cast in the wrapper)

    # Linear(64,128) + ReLU   (bf16 operands, f32 accumulation)
    h = jnp.maximum(jnp.dot(x, w1_ref[...], preferred_element_type=f32) + b1, 0.0)
    # Linear(128,64) + ReLU
    h = jnp.maximum(
        jnp.dot(h.astype(bf16), w2_ref[...], preferred_element_type=f32) + b2, 0.0)
    # Linear(64,64) (feeds the KAN layer, no activation)
    h = jnp.dot(h.astype(bf16), w3_ref[...], preferred_element_type=f32) + b3

    # ---- KAN layer (FastKAN-style RBF), fused into a single K=576 matmul ----
    # Scratch lanes (k-major, matching ws3.reshape(G*64, 64)):
    #   [0:64)              = SiLU(h)
    #   [64+k*64:128+k*64)  = exp(-((h - c_k) * INV_DENOM)^2)
    h_scaled = h * INV_DENOM
    kan_in_ref[:, 0:FEAT] = (h * jax.nn.sigmoid(h)).astype(bf16)
    for k in range(3):                                    # chunk 0: lanes [0, 256)
        phi = jnp.exp(-jnp.square(h_scaled - _GRID_SCALED[k]))
        kan_in_ref[:, FEAT * (k + 1):FEAT * (k + 2)] = phi.astype(bf16)
    acc = jnp.dot(kan_in_ref[:, 0:KAN_K0], kanw_ref[0:KAN_K0, :],
                  preferred_element_type=f32)
    for k in range(3, G):                                 # chunk 1: lanes [256, 576)
        phi = jnp.exp(-jnp.square(h_scaled - _GRID_SCALED[k]))
        kan_in_ref[:, FEAT * (k + 1):FEAT * (k + 2)] = phi.astype(bf16)
    h = acc + jnp.dot(kan_in_ref[:, KAN_K0:KAN_K], kanw_ref[KAN_K0:KAN_K, :],
                      preferred_element_type=f32)

    # Linear(64,32) + ReLU
    h = jnp.maximum(
        jnp.dot(h.astype(bf16), w4_ref[...], preferred_element_type=f32) + b4, 0.0)
    # Linear(32,2) — f32 (tiny), written into a lane-dense 128-wide padded slab.
    o_ref[...] = jnp.dot(h, w5_ref[...], preferred_element_type=f32) + b5


def _const_spec(shape):
    """Full-array BlockSpec whose block index is constant across the grid."""
    zeros = (0,) * len(shape)
    return pl.BlockSpec(shape, lambda i, z=zeros: z)


def _round_up(v, m):
    return ((v + m - 1) // m) * m


@functools.partial(jax.jit, static_argnames=("tile_b",))
def pkan_forward(x, params, tile_b=512):
    f32 = jnp.float32
    bf16 = jnp.bfloat16
    B = x.shape[0]
    (w1, b1, w2, b2, w3, b3, ws3, wb, w4, b4, w5, b5) = params

    # bf16 operand weights (biases stay f32).
    w1b, w2b, w3b, w4b = (w.astype(bf16) for w in (w1, w2, w3, w4))
    # Fused KAN weight: [ wb ; ws3.reshape(G*64, 64) ] -> (576, 64), k-major rows.
    kan_w = jnp.concatenate([wb, ws3.reshape(G * FEAT, FEAT)], axis=0).astype(bf16)
    # Lane-dense padding of the final Linear(32, 2) to 128 output lanes (f32).
    w5p = jnp.zeros((32, OUT_PAD), f32).at[:, :OUT_TRUE].set(w5)
    b5p = jnp.zeros((1, OUT_PAD), f32).at[:, :OUT_TRUE].set(b5)

    # Batch tile: 16-aligned (bf16 sublane packing), >= 2 grid steps when the
    # batch allows it (so both v7x TensorCores get work), never larger than the
    # padded batch.
    tile = int(tile_b)
    if B > 16:
        tile = min(tile, _round_up(-(-B // 2), 16))
    tile = max(16, min(tile, _round_up(B, 16)))
    Bp = _round_up(B, tile)

    # Cast input to bf16 and zero-pad the batch to a multiple of the tile.
    x = x.astype(bf16)
    if Bp != B:
        x = jnp.pad(x, ((0, Bp - B), (0, 0)))

    weights = (w1b, b1, w2b, b2, w3b, b3, kan_w, w4b, b4, w5p, b5p)

    in_specs = [pl.BlockSpec((tile, FEAT), lambda i: (i, 0))]
    in_specs += [_const_spec(p.shape) for p in weights]
    out_spec = pl.BlockSpec((tile, OUT_PAD), lambda i: (i, 0))

    # Honest cost hint: matmul MACs * 2, one sigmoid + G exps per feature/row.
    flops_per_row = 2 * (64 * 128 + 128 * 64 + 64 * 64 + KAN_K * 64
                         + 64 * 32 + 32 * OUT_PAD)
    weight_bytes = sum(int(p.size) * p.dtype.itemsize for p in weights)
    cost = pl.CostEstimate(
        flops=Bp * flops_per_row,
        transcendentals=Bp * (FEAT + G * FEAT),
        bytes_accessed=Bp * (FEAT * 2 + OUT_PAD * 4) + weight_bytes,
    )

    out = pl.pallas_call(
        _pkan_kernel,
        out_shape=jax.ShapeDtypeStruct((Bp, OUT_PAD), f32),
        grid_spec=pltpu.PrefetchScalarGridSpec(
            num_scalar_prefetch=0,
            grid=(Bp // tile,),
            in_specs=in_specs,
            out_specs=out_spec,
            scratch_shapes=[pltpu.VMEM((tile, KAN_K), bf16)],
        ),
        compiler_params=pltpu.CompilerParams(
            dimension_semantics=("parallel",)),
        cost_estimate=cost,
    )(x, *weights)

    return out[:B, :OUT_TRUE]


def init_params(key):
    """Deterministic synthetic parameters (PyTorch Linear weights stored transposed)."""
    ks = jax.random.split(key, 16)

    def lin(kw, kb, fan_in, fan_out):
        bound = 1.0 / jnp.sqrt(fan_in)
        w = jax.random.uniform(kw, (fan_in, fan_out), jnp.float32, -bound, bound)
        b = jax.random.uniform(kb, (1, fan_out), jnp.float32, -bound, bound)
        return w, b

    w1, b1 = lin(ks[0], ks[1], FEAT, 128)
    w2, b2 = lin(ks[2], ks[3], 128, 64)
    w3, b3 = lin(ks[4], ks[5], 64, 64)
    w4, b4 = lin(ks[6], ks[7], 64, 32)
    w5, b5 = lin(ks[8], ks[9], 32, OUT_TRUE)

    # KAN layer params (64 -> 64, G RBF centers per input feature).
    # ws rows follow the efficient-KAN feature-major flattening (i*G + k);
    # reshape offline to (G, FEAT, FEAT) so the fused weight is k-major.
    ws = 0.1 * jax.random.normal(ks[10], (FEAT * G, FEAT), jnp.float32)
    ws3 = ws.reshape(FEAT, G, FEAT).transpose(1, 0, 2)                 # (G, 64, 64)
    wb = 0.1 * jax.random.normal(ks[11], (FEAT, FEAT), jnp.float32)    # base weight^T

    return (w1, b1, w2, b2, w3, b3, ws3, wb, w4, b4, w5, b5)


def pkan_reference(x, params):
    """Pure-JAX f32 reference for correctness checking."""
    (w1, b1, w2, b2, w3, b3, ws3, wb, w4, b4, w5, b5) = params
    h = x.astype(jnp.float32)
    h = jnp.maximum(h @ w1 + b1, 0.0)
    h = jnp.maximum(h @ w2 + b2, 0.0)
    h = h @ w3 + b3
    base = (h * jax.nn.sigmoid(h)) @ wb
    grid = jnp.linspace(GRID_MIN, GRID_MAX, G).astype(jnp.float32)     # (G,)
    phi = jnp.exp(-jnp.square((h[:, :, None] - grid[None, None, :]) * INV_DENOM))
    spline = jnp.einsum("bik,kio->bo", phi, ws3)
    h = base + spline
    h = jnp.maximum(h @ w4 + b4, 0.0)
    return h @ w5 + b5


if __name__ == "__main__":
    key = jax.random.PRNGKey(0)
    kx, kp = jax.random.split(key)

    B = 8
    x = jax.random.normal(kx, (B, FEAT), jnp.float32)
    params = init_params(kp)

    out = pkan_forward(x, params)
    out = jax.block_until_ready(out)

    ref = pkan_reference(x, params)
    assert out.shape == (B, OUT_TRUE)
    # bf16 matmul operands (f32 accumulation): allow bf16-level tolerance.
    assert jnp.allclose(out, ref, atol=3e-2, rtol=3e-2), "kernel/reference mismatch"

    print("KERNEL_OK")
</pallas_src>

<mosaic_0001>
module attributes {stable_mosaic.version = 11 : i64} {
  func.func @_pkan_kernel(%arg0: i32, %arg1: memref<16x64xbf16, #tpu.memory_space<vmem>>, %arg2: memref<64x128xbf16, #tpu.memory_space<vmem>>, %arg3: memref<1x128xf32, #tpu.memory_space<vmem>>, %arg4: memref<128x64xbf16, #tpu.memory_space<vmem>>, %arg5: memref<1x64xf32, #tpu.memory_space<vmem>>, %arg6: memref<64x64xbf16, #tpu.memory_space<vmem>>, %arg7: memref<1x64xf32, #tpu.memory_space<vmem>>, %arg8: memref<576x64xbf16, #tpu.memory_space<vmem>>, %arg9: memref<64x32xbf16, #tpu.memory_space<vmem>>, %arg10: memref<1x32xf32, #tpu.memory_space<vmem>>, %arg11: memref<32x128xf32, #tpu.memory_space<vmem>>, %arg12: memref<1x128xf32, #tpu.memory_space<vmem>>, %arg13: memref<16x128xf32, #tpu.memory_space<vmem>>, %arg14: memref<16x576xbf16, #tpu.memory_space<vmem>>) attributes {dimension_semantics = [#tpu.dimension_semantics<parallel>], iteration_bounds = array<i64: 1>, scalar_prefetch = 0 : i64, scratch_operands = 1 : i64, tpu.core_type = #tpu.core_type<tc>, window_params = [{transform_indices = @transform_0, window_bounds = array<i64: 16, 64>}, {pipeline_mode = #tpu.pipeline_mode<synchronous>, transform_indices = @transform_1, window_bounds = array<i64: 64, 128>}, {pipeline_mode = #tpu.pipeline_mode<synchronous>, transform_indices = @transform_2, window_bounds = array<i64: 1, 128>}, {pipeline_mode = #tpu.pipeline_mode<synchronous>, transform_indices = @transform_3, window_bounds = array<i64: 128, 64>}, {pipeline_mode = #tpu.pipeline_mode<synchronous>, transform_indices = @transform_4, window_bounds = array<i64: 1, 64>}, {pipeline_mode = #tpu.pipeline_mode<synchronous>, transform_indices = @transform_5, window_bounds = array<i64: 64, 64>}, {pipeline_mode = #tpu.pipeline_mode<synchronous>, transform_indices = @transform_6, window_bounds = array<i64: 1, 64>}, {pipeline_mode = #tpu.pipeline_mode<synchronous>, transform_indices = @transform_7, window_bounds = array<i64: 576, 64>}, {pipeline_mode = #tpu.pipeline_mode<synchronous>, transform_indices = @transform_8, window_bounds = array<i64: 64, 32>}, {pipeline_mode = #tpu.pipeline_mode<synchronous>, transform_indices = @transform_9, window_bounds = array<i64: 1, 32>}, {pipeline_mode = #tpu.pipeline_mode<synchronous>, transform_indices = @transform_10, window_bounds = array<i64: 32, 128>}, {pipeline_mode = #tpu.pipeline_mode<synchronous>, transform_indices = @transform_11, window_bounds = array<i64: 1, 128>}, {transform_indices = @transform_12, window_bounds = array<i64: 16, 128>}]} {
    %c0 = arith.constant 0 : index
    %c0_0 = arith.constant 0 : index
    %0 = vector.load %arg3[%c0, %c0_0] : memref<1x128xf32, #tpu.memory_space<vmem>>, vector<1x128xf32>
    %c0_1 = arith.constant 0 : index
    %c0_2 = arith.constant 0 : index
    %1 = vector.load %arg5[%c0_1, %c0_2] : memref<1x64xf32, #tpu.memory_space<vmem>>, vector<1x64xf32>
    %c0_3 = arith.constant 0 : index
    %c0_4 = arith.constant 0 : index
    %2 = vector.load %arg7[%c0_3, %c0_4] : memref<1x64xf32, #tpu.memory_space<vmem>>, vector<1x64xf32>
    %c0_5 = arith.constant 0 : index
    %c0_6 = arith.constant 0 : index
    %3 = vector.load %arg10[%c0_5, %c0_6] : memref<1x32xf32, #tpu.memory_space<vmem>>, vector<1x32xf32>
    %c0_7 = arith.constant 0 : index
    %c0_8 = arith.constant 0 : index
    %4 = vector.load %arg12[%c0_7, %c0_8] : memref<1x128xf32, #tpu.memory_space<vmem>>, vector<1x128xf32>
    %c0_9 = arith.constant 0 : index
    %c0_10 = arith.constant 0 : index
    %5 = vector.load %arg1[%c0_9, %c0_10] : memref<16x64xbf16, #tpu.memory_space<vmem>>, vector<16x64xbf16>
    %c0_11 = arith.constant 0 : index
    %c0_12 = arith.constant 0 : index
    %6 = vector.load %arg2[%c0_11, %c0_12] : memref<64x128xbf16, #tpu.memory_space<vmem>>, vector<64x128xbf16>
    %cst = arith.constant dense<0.000000e+00> : vector<16x128xf32>
    %7 = tpu.matmul %5, %6, %cst {dimension_numbers = #tpu.dot_dimension_numbers<[1], [0], [0], [1], [0, 0, 1, 1], [], []>} : vector<16x64xbf16>, vector<64x128xbf16>, vector<16x128xf32> -> vector<16x128xf32>
    %8 = vector.broadcast %0 : vector<1x128xf32> to vector<16x128xf32>
    %9 = arith.addf %7, %8 : vector<16x128xf32>
    %cst_13 = arith.constant 0.000000e+00 : f32
    %10 = vector.broadcast %cst_13 : f32 to vector<16x128xf32>
    %11 = arith.maximumf %9, %10 : vector<16x128xf32>
    %12 = arith.truncf %11 : vector<16x128xf32> to vector<16x128xbf16>
    %c0_14 = arith.constant 0 : index
    %c0_15 = arith.constant 0 : index
    %13 = vector.load %arg4[%c0_14, %c0_15] : memref<128x64xbf16, #tpu.memory_space<vmem>>, vector<128x64xbf16>
    %cst_16 = arith.constant dense<0.000000e+00> : vector<16x64xf32>
    %14 = tpu.matmul %12, %13, %cst_16 {dimension_numbers = #tpu.dot_dimension_numbers<[1], [0], [0], [1], [0, 0, 1, 1], [], []>} : vector<16x128xbf16>, vector<128x64xbf16>, vector<16x64xf32> -> vector<16x64xf32>
    %15 = vector.broadcast %1 : vector<1x64xf32> to vector<16x64xf32>
    %16 = arith.addf %14, %15 : vector<16x64xf32>
    %cst_17 = arith.constant 0.000000e+00 : f32
    %17 = vector.broadcast %cst_17 : f32 to vector<16x64xf32>
    %18 = arith.maximumf %16, %17 : vector<16x64xf32>
    %19 = arith.truncf %18 : vector<16x64xf32> to vector<16x64xbf16>
    %c0_18 = arith.constant 0 : index
    %c0_19 = arith.constant 0 : index
    %20 = vector.load %arg6[%c0_18, %c0_19] : memref<64x64xbf16, #tpu.memory_space<vmem>>, vector<64x64xbf16>
    %cst_20 = arith.constant dense<0.000000e+00> : vector<16x64xf32>
    %21 = tpu.matmul %19, %20, %cst_20 {dimension_numbers = #tpu.dot_dimension_numbers<[1], [0], [0], [1], [0, 0, 1, 1], [], []>} : vector<16x64xbf16>, vector<64x64xbf16>, vector<16x64xf32> -> vector<16x64xf32>
    %22 = vector.broadcast %2 : vector<1x64xf32> to vector<16x64xf32>
    %23 = arith.addf %21, %22 : vector<16x64xf32>
    %cst_21 = arith.constant 1.750000e+00 : f32
    %24 = vector.broadcast %cst_21 : f32 to vector<16x64xf32>
    %25 = arith.mulf %23, %24 : vector<16x64xf32>
    %26 = arith.negf %23 : vector<16x64xf32>
    %27 = math.exp %26 : vector<16x64xf32>
    %cst_22 = arith.constant 1.000000e+00 : f32
    %28 = vector.broadcast %cst_22 : f32 to vector<16x64xf32>
    %29 = arith.addf %28, %27 : vector<16x64xf32>
    %30 = arith.divf %28, %29 : vector<16x64xf32>
    %31 = arith.mulf %23, %30 : vector<16x64xf32>
    %32 = arith.truncf %31 : vector<16x64xf32> to vector<16x64xbf16>
    %c0_23 = arith.constant 0 : index
    %c0_24 = arith.constant 0 : index
    %33 = vector.load %arg14[%c0_23, %c0_24] : memref<16x576xbf16, #tpu.memory_space<vmem>>, vector<16x64xbf16>
    tpu.vector_store %arg14[%c0_23, %c0_24], %32 {strides = array<i32>} : memref<16x576xbf16, #tpu.memory_space<vmem>>, vector<16x64xbf16>,
    %cst_25 = arith.constant -3.500000e+00 : f32
    %34 = vector.broadcast %cst_25 : f32 to vector<16x64xf32>
    %35 = arith.subf %25, %34 : vector<16x64xf32>
    %36 = arith.mulf %35, %35 : vector<16x64xf32>
    %cst_26 = arith.constant 0.000000e+00 : f32
    %37 = vector.broadcast %cst_26 : f32 to vector<16x64xf32>
    %38 = arith.subf %37, %36 : vector<16x64xf32>
    %39 = math.exp %38 : vector<16x64xf32>
    %40 = arith.truncf %39 : vector<16x64xf32> to vector<16x64xbf16>
    %c0_27 = arith.constant 0 : index
    %c64 = arith.constant 64 : index
    %41 = vector.load %arg14[%c0_27, %c64] : memref<16x576xbf16, #tpu.memory_space<vmem>>, vector<16x64xbf16>
    tpu.vector_store %arg14[%c0_27, %c64], %40 {strides = array<i32>} : memref<16x576xbf16, #tpu.memory_space<vmem>>, vector<16x64xbf16>,
    %cst_28 = arith.constant -2.500000e+00 : f32
    %42 = vector.broadcast %cst_28 : f32 to vector<16x64xf32>
    %43 = arith.subf %25, %42 : vector<16x64xf32>
    %44 = arith.mulf %43, %43 : vector<16x64xf32>
    %cst_29 = arith.constant 0.000000e+00 : f32
    %45 = vector.broadcast %cst_29 : f32 to vector<16x64xf32>
    %46 = arith.subf %45, %44 : vector<16x64xf32>
    %47 = math.exp %46 : vector<16x64xf32>
    %48 = arith.truncf %47 : vector<16x64xf32> to vector<16x64xbf16>
    %c0_30 = arith.constant 0 : index
    %c128 = arith.constant 128 : index
    %49 = vector.load %arg14[%c0_30, %c128] : memref<16x576xbf16, #tpu.memory_space<vmem>>, vector<16x64xbf16>
    tpu.vector_store %arg14[%c0_30, %c128], %48 {strides = array<i32>} : memref<16x576xbf16, #tpu.memory_space<vmem>>, vector<16x64xbf16>,
    %cst_31 = arith.constant -1.500000e+00 : f32
    %50 = vector.broadcast %cst_31 : f32 to vector<16x64xf32>
    %51 = arith.subf %25, %50 : vector<16x64xf32>
    %52 = arith.mulf %51, %51 : vector<16x64xf32>
    %cst_32 = arith.constant 0.000000e+00 : f32
    %53 = vector.broadcast %cst_32 : f32 to vector<16x64xf32>
    %54 = arith.subf %53, %52 : vector<16x64xf32>
    %55 = math.exp %54 : vector<16x64xf32>
    %56 = arith.truncf %55 : vector<16x64xf32> to vector<16x64xbf16>
    %c0_33 = arith.constant 0 : index
    %c192 = arith.constant 192 : index
    %57 = vector.load %arg14[%c0_33, %c192] : memref<16x576xbf16, #tpu.memory_space<vmem>>, vector<16x64xbf16>
    tpu.vector_store %arg14[%c0_33, %c192], %56 {strides = array<i32>} : memref<16x576xbf16, #tpu.memory_space<vmem>>, vector<16x64xbf16>,
    %c0_34 = arith.constant 0 : index
    %c0_35 = arith.constant 0 : index
    %58 = vector.load %arg14[%c0_34, %c0_35] : memref<16x576xbf16, #tpu.memory_space<vmem>>, vector<16x256xbf16>
    %c0_36 = arith.constant 0 : index
    %c0_37 = arith.constant 0 : index
    %59 = vector.load %arg8[%c0_36, %c0_37] : memref<576x64xbf16, #tpu.memory_space<vmem>>, vector<256x64xbf16>
    %cst_38 = arith.constant dense<0.000000e+00> : vector<16x64xf32>
    %60 = tpu.matmul %58, %59, %cst_38 {dimension_numbers = #tpu.dot_dimension_numbers<[1], [0], [0], [1], [0, 0, 1, 1], [], []>} : vector<16x256xbf16>, vector<256x64xbf16>, vector<16x64xf32> -> vector<16x64xf32>
    %cst_39 = arith.constant -5.000000e-01 : f32
    %61 = vector.broadcast %cst_39 : f32 to vector<16x64xf32>
    %62 = arith.subf %25, %61 : vector<16x64xf32>
    %63 = arith.mulf %62, %62 : vector<16x64xf32>
    %cst_40 = arith.constant 0.000000e+00 : f32
    %64 = vector.broadcast %cst_40 : f32 to vector<16x64xf32>
    %65 = arith.subf %64, %63 : vector<16x64xf32>
    %66 = math.exp %65 : vector<16x64xf32>
    %67 = arith.truncf %66 : vector<16x64xf32> to vector<16x64xbf16>
    %c0_41 = arith.constant 0 : index
    %c256 = arith.constant 256 : index
    %68 = vector.load %arg14[%c0_41, %c256] : memref<16x576xbf16, #tpu.memory_space<vmem>>, vector<16x64xbf16>
    tpu.vector_store %arg14[%c0_41, %c256], %67 {strides = array<i32>} : memref<16x576xbf16, #tpu.memory_space<vmem>>, vector<16x64xbf16>,
    %cst_42 = arith.constant 5.000000e-01 : f32
    %69 = vector.broadcast %cst_42 : f32 to vector<16x64xf32>
    %70 = arith.subf %25, %69 : vector<16x64xf32>
    %71 = arith.mulf %70, %70 : vector<16x64xf32>
    %cst_43 = arith.constant 0.000000e+00 : f32
    %72 = vector.broadcast %cst_43 : f32 to vector<16x64xf32>
    %73 = arith.subf %72, %71 : vector<16x64xf32>
    %74 = math.exp %73 : vector<16x64xf32>
    %75 = arith.truncf %74 : vector<16x64xf32> to vector<16x64xbf16>
    %c0_44 = arith.constant 0 : index
    %c320 = arith.constant 320 : index
    %76 = vector.load %arg14[%c0_44, %c320] : memref<16x576xbf16, #tpu.memory_space<vmem>>, vector<16x64xbf16>
    tpu.vector_store %arg14[%c0_44, %c320], %75 {strides = array<i32>} : memref<16x576xbf16, #tpu.memory_space<vmem>>, vector<16x64xbf16>,
    %cst_45 = arith.constant 1.500000e+00 : f32
    %77 = vector.broadcast %cst_45 : f32 to vector<16x64xf32>
    %78 = arith.subf %25, %77 : vector<16x64xf32>
    %79 = arith.mulf %78, %78 : vector<16x64xf32>
    %cst_46 = arith.constant 0.000000e+00 : f32
    %80 = vector.broadcast %cst_46 : f32 to vector<16x64xf32>
    %81 = arith.subf %80, %79 : vector<16x64xf32>
    %82 = math.exp %81 : vector<16x64xf32>
    %83 = arith.truncf %82 : vector<16x64xf32> to vector<16x64xbf16>
    %c0_47 = arith.constant 0 : index
    %c384 = arith.constant 384 : index
    %84 = vector.load %arg14[%c0_47, %c384] : memref<16x576xbf16, #tpu.memory_space<vmem>>, vector<16x64xbf16>
    tpu.vector_store %arg14[%c0_47, %c384], %83 {strides = array<i32>} : memref<16x576xbf16, #tpu.memory_space<vmem>>, vector<16x64xbf16>,
    %cst_48 = arith.constant 2.500000e+00 : f32
    %85 = vector.broadcast %cst_48 : f32 to vector<16x64xf32>
    %86 = arith.subf %25, %85 : vector<16x64xf32>
    %87 = arith.mulf %86, %86 : vector<16x64xf32>
    %cst_49 = arith.constant 0.000000e+00 : f32
    %88 = vector.broadcast %cst_49 : f32 to vector<16x64xf32>
    %89 = arith.subf %88, %87 : vector<16x64xf32>
    %90 = math.exp %89 : vector<16x64xf32>
    %91 = arith.truncf %90 : vector<16x64xf32> to vector<16x64xbf16>
    %c0_50 = arith.constant 0 : index
    %c448 = arith.constant 448 : index
    %92 = vector.load %arg14[%c0_50, %c448] : memref<16x576xbf16, #tpu.memory_space<vmem>>, vector<16x64xbf16>
    tpu.vector_store %arg14[%c0_50, %c448], %91 {strides = array<i32>} : memref<16x576xbf16, #tpu.memory_space<vmem>>, vector<16x64xbf16>,
    %cst_51 = arith.constant 3.500000e+00 : f32
    %93 = vector.broadcast %cst_51 : f32 to vector<16x64xf32>
    %94 = arith.subf %25, %93 : vector<16x64xf32>
    %95 = arith.mulf %94, %94 : vector<16x64xf32>
    %cst_52 = arith.constant 0.000000e+00 : f32
    %96 = vector.broadcast %cst_52 : f32 to vector<16x64xf32>
    %97 = arith.subf %96, %95 : vector<16x64xf32>
    %98 = math.exp %97 : vector<16x64xf32>
    %99 = arith.truncf %98 : vector<16x64xf32> to vector<16x64xbf16>
    %c0_53 = arith.constant 0 : index
    %c512 = arith.constant 512 : index
    %100 = vector.load %arg14[%c0_53, %c512] : memref<16x576xbf16, #tpu.memory_space<vmem>>, vector<16x64xbf16>
    tpu.vector_store %arg14[%c0_53, %c512], %99 {strides = array<i32>} : memref<16x576xbf16, #tpu.memory_space<vmem>>, vector<16x64xbf16>,
    %c0_54 = arith.constant 0 : index
    %c256_55 = arith.constant 256 : index
    %101 = vector.load %arg14[%c0_54, %c256_55] : memref<16x576xbf16, #tpu.memory_space<vmem>>, vector<16x320xbf16>
    %c256_56 = arith.constant 256 : index
    %c0_57 = arith.constant 0 : index
    %102 = vector.load %arg8[%c256_56, %c0_57] : memref<576x64xbf16, #tpu.memory_space<vmem>>, vector<320x64xbf16>
    %cst_58 = arith.constant dense<0.000000e+00> : vector<16x64xf32>
    %103 = tpu.matmul %101, %102, %cst_58 {dimension_numbers = #tpu.dot_dimension_numbers<[1], [0], [0], [1], [0, 0, 1, 1], [], []>} : vector<16x320xbf16>, vector<320x64xbf16>, vector<16x64xf32> -> vector<16x64xf32>
    %104 = arith.addf %60, %103 : vector<16x64xf32>
    %105 = arith.truncf %104 : vector<16x64xf32> to vector<16x64xbf16>
    %c0_59 = arith.constant 0 : index
    %c0_60 = arith.constant 0 : index
    %106 = vector.load %arg9[%c0_59, %c0_60] : memref<64x32xbf16, #tpu.memory_space<vmem>>, vector<64x32xbf16>
    %cst_61 = arith.constant dense<0.000000e+00> : vector<16x32xf32>
    %107 = tpu.matmul %105, %106, %cst_61 {dimension_numbers = #tpu.dot_dimension_numbers<[1], [0], [0], [1], [0, 0, 1, 1], [], []>} : vector<16x64xbf16>, vector<64x32xbf16>, vector<16x32xf32> -> vector<16x32xf32>
    %108 = vector.broadcast %3 : vector<1x32xf32> to vector<16x32xf32>
    %109 = arith.addf %107, %108 : vector<16x32xf32>
    %cst_62 = arith.constant 0.000000e+00 : f32
    %110 = vector.broadcast %cst_62 : f32 to vector<16x32xf32>
    %111 = arith.maximumf %109, %110 : vector<16x32xf32>
    %c0_63 = arith.constant 0 : index
    %c0_64 = arith.constant 0 : index
    %112 = vector.load %arg11[%c0_63, %c0_64] : memref<32x128xf32, #tpu.memory_space<vmem>>, vector<32x128xf32>
    %cst_65 = arith.constant dense<0.000000e+00> : vector<16x128xf32>
    %113 = tpu.matmul %111, %112, %cst_65 {dimension_numbers = #tpu.dot_dimension_numbers<[1], [0], [0], [1], [0, 0, 1, 1], [], []>} : vector<16x32xf32>, vector<32x128xf32>, vector<16x128xf32> -> vector<16x128xf32>
    %114 = vector.broadcast %4 : vector<1x128xf32> to vector<16x128xf32>
    %115 = arith.addf %113, %114 : vector<16x128xf32>
    %c0_66 = arith.constant 0 : index
    %c0_67 = arith.constant 0 : index
    %116 = vector.load %arg13[%c0_66, %c0_67] : memref<16x128xf32, #tpu.memory_space<vmem>>, vector<16x128xf32>
    tpu.vector_store %arg13[%c0_66, %c0_67], %115 {strides = array<i32>} : memref<16x128xf32, #tpu.memory_space<vmem>>, vector<16x128xf32>,
    return
  }
  func.func @transform_0(%arg0: i32) -> (i32, i32) {
    %c0_i32 = arith.constant 0 : i32
    %c0_i32_0 = arith.constant 0 : i32
    return %arg0, %c0_i32 : i32, i32
  }
  func.func @transform_1(%arg0: i32) -> (i32, i32) {
    %c0_i32 = arith.constant 0 : i32
    %c0_i32_0 = arith.constant 0 : i32
    %c0_i32_1 = arith.constant 0 : i32
    return %c0_i32, %c0_i32_0 : i32, i32
  }
  func.func @transform_2(%arg0: i32) -> (i32, i32) {
    %c0_i32 = arith.constant 0 : i32
    %c0_i32_0 = arith.constant 0 : i32
    %c0_i32_1 = arith.constant 0 : i32
    return %c0_i32, %c0_i32_0 : i32, i32
  }
  func.func @transform_3(%arg0: i32) -> (i32, i32) {
    %c0_i32 = arith.constant 0 : i32
    %c0_i32_0 = arith.constant 0 : i32
    %c0_i32_1 = arith.constant 0 : i32
    return %c0_i32, %c0_i32_0 : i32, i32
  }
  func.func @transform_4(%arg0: i32) -> (i32, i32) {
    %c0_i32 = arith.constant 0 : i32
    %c0_i32_0 = arith.constant 0 : i32
    %c0_i32_1 = arith.constant 0 : i32
    return %c0_i32, %c0_i32_0 : i32, i32
  }
  func.func @transform_5(%arg0: i32) -> (i32, i32) {
    %c0_i32 = arith.constant 0 : i32
    %c0_i32_0 = arith.constant 0 : i32
    %c0_i32_1 = arith.constant 0 : i32
    return %c0_i32, %c0_i32_0 : i32, i32
  }
  func.func @transform_6(%arg0: i32) -> (i32, i32) {
    %c0_i32 = arith.constant 0 : i32
    %c0_i32_0 = arith.constant 0 : i32
    %c0_i32_1 = arith.constant 0 : i32
    return %c0_i32, %c0_i32_0 : i32, i32
  }
  func.func @transform_7(%arg0: i32) -> (i32, i32) {
    %c0_i32 = arith.constant 0 : i32
    %c0_i32_0 = arith.constant 0 : i32
    %c0_i32_1 = arith.constant 0 : i32
    return %c0_i32, %c0_i32_0 : i32, i32
  }
  func.func @transform_8(%arg0: i32) -> (i32, i32) {
    %c0_i32 = arith.constant 0 : i32
    %c0_i32_0 = arith.constant 0 : i32
    %c0_i32_1 = arith.constant 0 : i32
    return %c0_i32, %c0_i32_0 : i32, i32
  }
  func.func @transform_9(%arg0: i32) -> (i32, i32) {
    %c0_i32 = arith.constant 0 : i32
    %c0_i32_0 = arith.constant 0 : i32
    %c0_i32_1 = arith.constant 0 : i32
    return %c0_i32, %c0_i32_0 : i32, i32
  }
  func.func @transform_10(%arg0: i32) -> (i32, i32) {
    %c0_i32 = arith.constant 0 : i32
    %c0_i32_0 = arith.constant 0 : i32
    %c0_i32_1 = arith.constant 0 : i32
    return %c0_i32, %c0_i32_0 : i32, i32
  }
  func.func @transform_11(%arg0: i32) -> (i32, i32) {
    %c0_i32 = arith.constant 0 : i32
    %c0_i32_0 = arith.constant 0 : i32
    %c0_i32_1 = arith.constant 0 : i32
    return %c0_i32, %c0_i32_0 : i32, i32
  }
  func.func @transform_12(%arg0: i32) -> (i32, i32) {
    %c0_i32 = arith.constant 0 : i32
    %c0_i32_0 = arith.constant 0 : i32
    return %arg0, %c0_i32 : i32, i32
  }
}

</mosaic_0001>

<llo_original>
// kernel: pkan_forward.1
$region0: #{pkan_forward.1}
  #allocation0 [shape = 'u32[]', space=smem, size = 0x4, offset = 0x4, fixed_abs, tag = 'smem constant byte address 0x4 - core index']
  #allocation1 [shape = 'u32[144,128]{1,0:T(1,128)}', space=vmem, size = 0x12000, scoped, tag = 'internal scratch']
  #allocation2 [shape = 'bf16[16,576]{1,0:T(16,128)(2,1)}', space=vmem, size = 0x5000, scoped, tag = 'scratch operand']
  %s0 = inlined_call_operand.vmem [shape: bf16[16,64], index: 0, kind: input, shape index: {}]
  %s1 = inlined_call_operand.vmem [shape: bf16[64,128], index: 1, kind: input, shape index: {}]
  %s2 = inlined_call_operand.vmem [shape: f32[1,128], index: 2, kind: input, shape index: {}]
  %s3 = inlined_call_operand.vmem [shape: bf16[128,64], index: 3, kind: input, shape index: {}]
  %s4 = inlined_call_operand.vmem [shape: f32[1,64], index: 4, kind: input, shape index: {}]
  %s5 = inlined_call_operand.vmem [shape: bf16[64,64], index: 5, kind: input, shape index: {}]
  %s6 = inlined_call_operand.vmem [shape: f32[1,64], index: 6, kind: input, shape index: {}]
  %s7 = inlined_call_operand.vmem [shape: bf16[576,64], index: 7, kind: input, shape index: {}]
  %s8 = inlined_call_operand.vmem [shape: bf16[64,32], index: 8, kind: input, shape index: {}]
  %s9 = inlined_call_operand.vmem [shape: f32[1,32], index: 9, kind: input, shape index: {}]
  %s10 = inlined_call_operand.vmem [shape: f32[32,128], index: 10, kind: input, shape index: {}]
  %s11 = inlined_call_operand.vmem [shape: f32[1,128], index: 11, kind: input, shape index: {}]
  %s12 = inlined_call_operand.vmem [shape: f32[16,128], index: 12, kind: output, shape index: {}]
  %s13 = sld [smem:[#allocation0]]
  $region58: #{pkan_forward.1} parent=0
    _
  %s15 = ssub.s32 1, %s13
  %s16 = scalar_select 0, %s15, %s13
  // Predicated region
  $region2: #{pkan_forward.1} parent=0 // pred_check
    _
  $region3: #{pkan_forward.1} parent=0 // pred_check_branch
    %18 = sbr.rel (0) target = $region5
  $region4: #{pkan_forward.1} parent=0 // pred_region
    _
  $region5: #{pkan_forward.1} parent=0 // pred_fallthru
    _
  // Predicated region
  $region6: #{pkan_forward.1} parent=0 // pred_check
    _
  $region7: #{pkan_forward.1} parent=0 // pred_check_branch
    %20 = sbr.rel (0) target = $region9
  $region8: #{pkan_forward.1} parent=0 // pred_region
    _
  $region9: #{pkan_forward.1} parent=0 // pred_fallthru
    _
  // Predicated region
  $region10: #{pkan_forward.1} parent=0 // pred_check
    _
  $region11: #{pkan_forward.1} parent=0 // pred_check_branch
    %22 = sbr.rel (0) target = $region13
  $region12: #{pkan_forward.1} parent=0 // pred_region
    _
  $region13: #{pkan_forward.1} parent=0 // pred_fallthru
    _
  // Predicated region
  $region14: #{pkan_forward.1} parent=0 // pred_check
    _
  $region15: #{pkan_forward.1} parent=0 // pred_check_branch
    %24 = sbr.rel (0) target = $region17
  $region16: #{pkan_forward.1} parent=0 // pred_region
    _
  $region17: #{pkan_forward.1} parent=0 // pred_fallthru
    _
  // Predicated region
  $region18: #{pkan_forward.1} parent=0 // pred_check
    _
  $region19: #{pkan_forward.1} parent=0 // pred_check_branch
    %26 = sbr.rel (0) target = $region21
  $region20: #{pkan_forward.1} parent=0 // pred_region
    _
  $region21: #{pkan_forward.1} parent=0 // pred_fallthru
    _
  // Predicated region
  $region22: #{pkan_forward.1} parent=0 // pred_check
    _
  $region23: #{pkan_forward.1} parent=0 // pred_check_branch
    %28 = sbr.rel (0) target = $region25
  $region24: #{pkan_forward.1} parent=0 // pred_region
    _
  $region25: #{pkan_forward.1} parent=0 // pred_fallthru
    _
  // Predicated region
  $region26: #{pkan_forward.1} parent=0 // pred_check
    _
  $region27: #{pkan_forward.1} parent=0 // pred_check_branch
    %30 = sbr.rel (0) target = $region29
  $region28: #{pkan_forward.1} parent=0 // pred_region
    _
  $region29: #{pkan_forward.1} parent=0 // pred_fallthru
    _
  // Predicated region
  $region30: #{pkan_forward.1} parent=0 // pred_check
    _
  $region31: #{pkan_forward.1} parent=0 // pred_check_branch
    %32 = sbr.rel (0) target = $region33
  $region32: #{pkan_forward.1} parent=0 // pred_region
    _
  $region33: #{pkan_forward.1} parent=0 // pred_fallthru
    _
  // Predicated region
  $region34: #{pkan_forward.1} parent=0 // pred_check
    _
  $region35: #{pkan_forward.1} parent=0 // pred_check_branch
    %34 = sbr.rel (0) target = $region37
  $region36: #{pkan_forward.1} parent=0 // pred_region
    _
  $region37: #{pkan_forward.1} parent=0 // pred_fallthru
    _
  // Predicated region
  $region38: #{pkan_forward.1} parent=0 // pred_check
    _
  $region39: #{pkan_forward.1} parent=0 // pred_check_branch
    %36 = sbr.rel (0) target = $region41
  $region40: #{pkan_forward.1} parent=0 // pred_region
    _
  $region41: #{pkan_forward.1} parent=0 // pred_fallthru
    _
  // Predicated region
  $region42: #{pkan_forward.1} parent=0 // pred_check
    _
  $region43: #{pkan_forward.1} parent=0 // pred_check_branch
    %38 = sbr.rel (0) target = $region45
  $region44: #{pkan_forward.1} parent=0 // pred_region
    _
  $region45: #{pkan_forward.1} parent=0 // pred_fallthru
    _
  // Predicated region
  $region46: #{pkan_forward.1} parent=0 // pred_check
    _
  $region47: #{pkan_forward.1} parent=0 // pred_check_branch
    %40 = sbr.rel (0) target = $region49
  $region48: #{pkan_forward.1} parent=0 // pred_region
    _
  $region49: #{pkan_forward.1} parent=0 // pred_fallthru
    _
  %v42 = vld [vmem:[%s2] sm:$0x1]
  %v43 = vld [vmem:[%s4] sm:$0x1]
  %v44 = vld [vmem:[%s6] sm:$0x1]
  %v45 = vld [vmem:[%s9] sm:$0x1]
  %v46 = vld [vmem:[%s11] sm:$0x1]
  %v47 = vld [vmem:[%s0] sm:$0xf]
  %v48 = vld [vmem:[%s0 + $0x4] sm:$0xf]
  %v49 = vld [vmem:[%s1] sm:$0xf]
  %v50 = vld [vmem:[%s1 + $0x4] sm:$0xf]
  %v51 = vld [vmem:[%s1 + $0x8] sm:$0xf]
  %v52 = vld [vmem:[%s1 + $0xc] sm:$0xf]
  %v53 = vld [vmem:[%s1 + $0x10] sm:$0xf]
  %v54 = vld [vmem:[%s1 + $0x14] sm:$0xf]
  %v55 = vld [vmem:[%s1 + $0x18] sm:$0xf]
  %v56 = vld [vmem:[%s1 + $0x1c] sm:$0xf]
  %v58 = vlaneseq
  %v59 = vshrl.u32 %v58, 7
  %v60 = vsub.s32 0, %v59
  %v61 = vrot.slane %v42, %v60
  %v65 = vunpack.c.l.b16 %v47
  %v66 = vunpack.c.l.b16 %v48
  %v67 = vpack.c.b16 %v66, %v65
  %v76 = vunpack.c.l.b16 %v49
  %v77 = vunpack.c.l.b16 %v50
  %v78 = vunpack.c.l.b16 %v51
  %v79 = vunpack.c.l.b16 %v52
  %v80 = vunpack.c.l.b16 %v53
  %v81 = vunpack.c.l.b16 %v54
  %v82 = vunpack.c.l.b16 %v55
  %v83 = vunpack.c.l.b16 %v56
  %v84 = vpack.c.b16 %v77, %v76
  %v85 = vpack.c.b16 %v79, %v78
  %v86 = vpack.c.b16 %v81, %v80
  %v87 = vpack.c.b16 %v83, %v82
  %vm92 = vcmask 523264
  %v94 = vsel %vm92, %v67, 0
  %96 = vmatprep.subr.bf16.mxu0 0
  %97 = vmatpush1.bf16.msra.mxu0 %v84
  %98 = vmatprep.subr.bf16.mxu0 0
  %99 = vmatpush1.bf16.msra.mxu0 %v85
  %100 = vmatprep.subr.bf16.mxu0 0
  %101 = vmatpush1.bf16.msra.mxu0 %v86
  %102 = vmatprep.subr.bf16.mxu0 0
  %103 = vmatpush1.bf16.msra.mxu0 %v87
  %104 = vmatprep.subr.bf16.mxu0 0
  %105 = vmatpush1.bf16.msra.mxu0 0
  %106 = vmatprep.subr.bf16.mxu0 0
  %107 = vmatpush1.bf16.msra.mxu0 0
  %108 = vmatprep.subr.bf16.mxu0 0
  %109 = vmatpush1.bf16.msra.mxu0 0
  %110 = vmatprep.subr.bf16.mxu0 0
  %111 = vmatpush1.bf16.msra.mxu0 0
  %112 = vmatprep.subr.bf16.mxu0 0
  %113 = vmatpush1.bf16.msra.mxu0 0
  %114 = vmatprep.subr.bf16.mxu0 0
  %115 = vmatpush1.bf16.msra.mxu0 0
  %116 = vmatprep.subr.bf16.mxu0 0
  %117 = vmatpush1.bf16.msra.mxu0 0
  %118 = vmatprep.subr.bf16.mxu0 0
  %119 = vmatpush1.bf16.msra.mxu0 0
  %120 = vmatprep.subr.bf16.mxu0 0
  %121 = vmatpush1.bf16.msra.mxu0 0
  %122 = vmatprep.subr.bf16.mxu0 0
  %123 = vmatpush1.bf16.msra.mxu0 0
  %124 = vmatprep.subr.bf16.mxu0 0
  %125 = vmatpush1.bf16.msra.mxu0 0
  %126 = vmatprep.subr.bf16.mxu0 0
  %127 = vmatpush1.bf16.msra.mxu0 0
  %128 = vmatprep.mubr.bf16.mxu0 0
  %129 = vmatmul.mubr.bf16.gmra.mrb[0].mxu0 %v94
  %v130 = vpop.f32.mrb[0].mxu0
  %v131 = vadd.f32 %v61, %v130
  %v132 = vpop.f32.mrb[0].mxu0
  %v133 = vpop.f32.mrb[0].mxu0
  %v134 = vadd.f32 %v61, %v133
  %v135 = vpop.f32.mrb[0].mxu0
  %136 = vdwg.mxu0
  %v137 = vmax.f32 %v131, 0.0
  %v138 = vmax.f32 %v134, 0.0
  %v139 = vpack.c.bf16 %v138, %v137
  %v140 = vld [vmem:[%s3] sm:$0xf]
  %v141 = vld [vmem:[%s3 + $0x4] sm:$0xf]
  %v142 = vld [vmem:[%s3 + $0x8] sm:$0xf]
  %v143 = vld [vmem:[%s3 + $0xc] sm:$0xf]
  %v144 = vld [vmem:[%s3 + $0x10] sm:$0xf]
  %v145 = vld [vmem:[%s3 + $0x14] sm:$0xf]
  %v146 = vld [vmem:[%s3 + $0x18] sm:$0xf]
  %v147 = vld [vmem:[%s3 + $0x1c] sm:$0xf]
  %v148 = vld [vmem:[%s3 + $0x20] sm:$0xf]
  %v149 = vld [vmem:[%s3 + $0x24] sm:$0xf]
  %v150 = vld [vmem:[%s3 + $0x28] sm:$0xf]
  %v151 = vld [vmem:[%s3 + $0x2c] sm:$0xf]
  %v152 = vld [vmem:[%s3 + $0x30] sm:$0xf]
  %v153 = vld [vmem:[%s3 + $0x34] sm:$0xf]
  %v154 = vld [vmem:[%s3 + $0x38] sm:$0xf]
  %v155 = vld [vmem:[%s3 + $0x3c] sm:$0xf]
  %v157 = vlaneseq
  %v158 = vshrl.u32 %v157, 7
  %v159 = vsub.s32 0, %v158
  %v160 = vrot.slane %v43, %v159
  %v178 = vunpack.c.l.b16 %v140
  %v179 = vunpack.c.l.b16 %v141
  %v180 = vunpack.c.l.b16 %v142
  %v181 = vunpack.c.l.b16 %v143
  %v182 = vunpack.c.l.b16 %v144
  %v183 = vunpack.c.l.b16 %v145
  %v184 = vunpack.c.l.b16 %v146
  %v185 = vunpack.c.l.b16 %v147
  %v186 = vunpack.c.l.b16 %v148
  %v187 = vunpack.c.l.b16 %v149
  %v188 = vunpack.c.l.b16 %v150
  %v189 = vunpack.c.l.b16 %v151
  %v190 = vunpack.c.l.b16 %v152
  %v191 = vunpack.c.l.b16 %v153
  %v192 = vunpack.c.l.b16 %v154
  %v193 = vunpack.c.l.b16 %v155
  %v194 = vpack.c.b16 %v179, %v178
  %v195 = vpack.c.b16 %v181, %v180
  %v196 = vpack.c.b16 %v183, %v182
  %v197 = vpack.c.b16 %v185, %v184
  %v198 = vpack.c.b16 %v187, %v186
  %v199 = vpack.c.b16 %v189, %v188
  %v200 = vpack.c.b16 %v191, %v190
  %v201 = vpack.c.b16 %v193, %v192
  %210 = vmatprep.subr.bf16.mxu0 0
  %211 = vmatpush1.bf16.msra.mxu0 %v194
  %212 = vmatprep.subr.bf16.mxu0 0
  %213 = vmatpush1.bf16.msra.mxu0 %v195
  %214 = vmatprep.subr.bf16.mxu0 0
  %215 = vmatpush1.bf16.msra.mxu0 %v196
  %216 = vmatprep.subr.bf16.mxu0 0
  %217 = vmatpush1.bf16.msra.mxu0 %v197
  %218 = vmatprep.subr.bf16.mxu0 0
  %219 = vmatpush1.bf16.msra.mxu0 %v198
  %220 = vmatprep.subr.bf16.mxu0 0
  %221 = vmatpush1.bf16.msra.mxu0 %v199
  %222 = vmatprep.subr.bf16.mxu0 0
  %223 = vmatpush1.bf16.msra.mxu0 %v200
  %224 = vmatprep.subr.bf16.mxu0 0
  %225 = vmatpush1.bf16.msra.mxu0 %v201
  %226 = vmatprep.subr.bf16.mxu0 0
  %227 = vmatpush1.bf16.msra.mxu0 0
  %228 = vmatprep.subr.bf16.mxu0 0
  %229 = vmatpush1.bf16.msra.mxu0 0
  %230 = vmatprep.subr.bf16.mxu0 0
  %231 = vmatpush1.bf16.msra.mxu0 0
  %232 = vmatprep.subr.bf16.mxu0 0
  %233 = vmatpush1.bf16.msra.mxu0 0
  %234 = vmatprep.subr.bf16.mxu0 0
  %235 = vmatpush1.bf16.msra.mxu0 0
  %236 = vmatprep.subr.bf16.mxu0 0
  %237 = vmatpush1.bf16.msra.mxu0 0
  %238 = vmatprep.subr.bf16.mxu0 0
  %239 = vmatpush1.bf16.msra.mxu0 0
  %240 = vmatprep.subr.bf16.mxu0 0
  %241 = vmatpush1.bf16.msra.mxu0 0
  %242 = vmatprep.mubr.bf16.mxu0 0
  %243 = vmatmul.mubr.bf16.gmra.mrb[0].mxu0 %v139
  %v244 = vpop.f32.mrb[0].mxu0
  %v245 = vadd.f32 %v160, %v244
  %v246 = vpop.f32.mrb[0].mxu0
  %v247 = vpop.f32.mrb[0].mxu0
  %v248 = vadd.f32 %v160, %v247
  %v249 = vpop.f32.mrb[0].mxu0
  %250 = vdwg.mxu0
  %v251 = vmax.f32 %v245, 0.0
  %v252 = vmax.f32 %v248, 0.0
  %v253 = vpack.c.bf16 %v252, %v251
  %v254 = vld [vmem:[%s5] sm:$0xf]
  %v255 = vld [vmem:[%s5 + $0x4] sm:$0xf]
  %v256 = vld [vmem:[%s5 + $0x8] sm:$0xf]
  %v257 = vld [vmem:[%s5 + $0xc] sm:$0xf]
  %v258 = vld [vmem:[%s5 + $0x10] sm:$0xf]
  %v259 = vld [vmem:[%s5 + $0x14] sm:$0xf]
  %v260 = vld [vmem:[%s5 + $0x18] sm:$0xf]
  %v261 = vld [vmem:[%s5 + $0x1c] sm:$0xf]
  %v263 = vlaneseq
  %v264 = vshrl.u32 %v263, 7
  %v265 = vsub.s32 0, %v264
  %v266 = vrot.slane %v44, %v265
  %v276 = vunpack.c.l.b16 %v254
  %v277 = vunpack.c.l.b16 %v255
  %v278 = vunpack.c.l.b16 %v256
  %v279 = vunpack.c.l.b16 %v257
  %v280 = vunpack.c.l.b16 %v258
  %v281 = vunpack.c.l.b16 %v259
  %v282 = vunpack.c.l.b16 %v260
  %v283 = vunpack.c.l.b16 %v261
  %v284 = vpack.c.b16 %v277, %v276
  %v285 = vpack.c.b16 %v279, %v278
  %v286 = vpack.c.b16 %v281, %v280
  %v287 = vpack.c.b16 %v283, %v282
  %v293 = vsel %vm92, %v253, 0
  %295 = vmatprep.subr.bf16.mxu0 0
  %296 = vmatpush1.bf16.msra.mxu0 %v284
  %297 = vmatprep.subr.bf16.mxu0 0
  %298 = vmatpush1.bf16.msra.mxu0 %v285
  %299 = vmatprep.subr.bf16.mxu0 0
  %300 = vmatpush1.bf16.msra.mxu0 %v286
  %301 = vmatprep.subr.bf16.mxu0 0
  %302 = vmatpush1.bf16.msra.mxu0 %v287
  %303 = vmatprep.subr.bf16.mxu0 0
  %304 = vmatpush1.bf16.msra.mxu0 0
  %305 = vmatprep.subr.bf16.mxu0 0
  %306 = vmatpush1.bf16.msra.mxu0 0
  %307 = vmatprep.subr.bf16.mxu0 0
  %308 = vmatpush1.bf16.msra.mxu0 0
  %309 = vmatprep.subr.bf16.mxu0 0
  %310 = vmatpush1.bf16.msra.mxu0 0
  %311 = vmatprep.subr.bf16.mxu0 0
  %312 = vmatpush1.bf16.msra.mxu0 0
  %313 = vmatprep.subr.bf16.mxu0 0
  %314 = vmatpush1.bf16.msra.mxu0 0
  %315 = vmatprep.subr.bf16.mxu0 0
  %316 = vmatpush1.bf16.msra.mxu0 0
  %317 = vmatprep.subr.bf16.mxu0 0
  %318 = vmatpush1.bf16.msra.mxu0 0
  %319 = vmatprep.subr.bf16.mxu0 0
  %320 = vmatpush1.bf16.msra.mxu0 0
  %321 = vmatprep.subr.bf16.mxu0 0
  %322 = vmatpush1.bf16.msra.mxu0 0
  %323 = vmatprep.subr.bf16.mxu0 0
  %324 = vmatpush1.bf16.msra.mxu0 0
  %325 = vmatprep.subr.bf16.mxu0 0
  %326 = vmatpush1.bf16.msra.mxu0 0
  %327 = vmatprep.mubr.bf16.mxu0 0
  %328 = vmatmul.mubr.bf16.gmra.mrb[0].mxu0 %v293
  %v329 = vpop.f32.mrb[0].mxu0
  %v330 = vadd.f32 %v266, %v329
  %v331 = vpop.f32.mrb[0].mxu0
  %v332 = vpop.f32.mrb[0].mxu0
  %v333 = vadd.f32 %v266, %v332
  %v334 = vpop.f32.mrb[0].mxu0
  %335 = vdwg.mxu0
  %v336 = vmul.f32 %v330, 1.75
  %v337 = vmul.f32 %v333, 1.75
  %v338 = vxor.u32 %v330, 2147483648
  %v339 = vxor.u32 %v333, 2147483648
  %v340 = vmul.f32 %v338, 1.442695
  %v341 = vpow.pop %v340
  %v342 = vmul.f32 %v339, 1.442695
  %v343 = vpow.pop %v342
  %v344 = vadd.f32 %v341, 1.0
  %v345 = vadd.f32 %v343, 1.0
  %v346 = vrcp.pop %v344
  %v347 = vmul.f32 1.0, %v346
  %v348 = vrcp.pop %v345
  %v349 = vmul.f32 1.0, %v348
  %v350 = vmul.f32 %v330, %v347
  %v351 = vmul.f32 %v333, %v349
  %v352 = vpack.c.bf16 %v351, %v350
  %353 = vst.msk [vmem:[#allocation2] sm:$0xff] %vm92, %v352
  %v354 = vsub.f32 %v336, -3.5
  %v355 = vsub.f32 %v337, -3.5
  %v356 = vmul.f32 %v354, %v354
  %v357 = vmul.f32 %v355, %v355
  %v358 = vsub.f32 0.0, %v356
  %v359 = vsub.f32 0.0, %v357
  %v360 = vmul.f32 %v358, 1.442695
  %v361 = vpow.pop %v360
  %v362 = vmul.f32 %v359, 1.442695
  %v363 = vpow.pop %v362
  %v364 = vpack.c.bf16 %v363, %v361
  %366 = vrot.lane.b32.xlu0 %v364, 64
  %v367 = vpop.permute.xlu0 %366
  %vm369 = vcmask 1048064
  %370 = vst.msk [vmem:[#allocation2] sm:$0xff] %vm369, %v367
  %v371 = vsub.f32 %v336, -2.5
  %v372 = vsub.f32 %v337, -2.5
  %v373 = vmul.f32 %v371, %v371
  %v374 = vmul.f32 %v372, %v372
  %v375 = vsub.f32 0.0, %v373
  %v376 = vsub.f32 0.0, %v374
  %v377 = vmul.f32 %v375, 1.442695
  %v378 = vpow.pop %v377
  %v379 = vmul.f32 %v376, 1.442695
  %v380 = vpow.pop %v379
  %v381 = vpack.c.bf16 %v380, %v378
  %382 = vst.msk [vmem:[#allocation2 + $0x8] sm:$0xff] %vm92, %v381
  %v383 = vsub.f32 %v336, -1.5
  %v384 = vsub.f32 %v337, -1.5
  %v385 = vmul.f32 %v383, %v383
  %v386 = vmul.f32 %v384, %v384
  %v387 = vsub.f32 0.0, %v385
  %v388 = vsub.f32 0.0, %v386
  %v389 = vmul.f32 %v387, 1.442695
  %v390 = vpow.pop %v389
  %v391 = vmul.f32 %v388, 1.442695
  %v392 = vpow.pop %v391
  %v393 = vpack.c.bf16 %v392, %v390
  %395 = vrot.lane.b32.xlu0 %v393, 64
  %v396 = vpop.permute.xlu0 %395
  %398 = vst.msk [vmem:[#allocation2 + $0x8] sm:$0xff] %vm369, %v396
  %v399 = vld [vmem:[#allocation2] sm:$0xff]
  %v400 = vld [vmem:[#allocation2 + $0x8] sm:$0xff]
  %v401 = vld [vmem:[%s7] sm:$0xf]
  %v402 = vld [vmem:[%s7 + $0x4] sm:$0xf]
  %v403 = vld [vmem:[%s7 + $0x8] sm:$0xf]
  %v404 = vld [vmem:[%s7 + $0xc] sm:$0xf]
  %v405 = vld [vmem:[%s7 + $0x10] sm:$0xf]
  %v406 = vld [vmem:[%s7 + $0x14] sm:$0xf]
  %v407 = vld [vmem:[%s7 + $0x18] sm:$0xf]
  %v408 = vld [vmem:[%s7 + $0x1c] sm:$0xf]
  %v409 = vld [vmem:[%s7 + $0x20] sm:$0xf]
  %v410 = vld [vmem:[%s7 + $0x24] sm:$0xf]
  %v411 = vld [vmem:[%s7 + $0x28] sm:$0xf]
  %v412 = vld [vmem:[%s7 + $0x2c] sm:$0xf]
  %v413 = vld [vmem:[%s7 + $0x30] sm:$0xf]
  %v414 = vld [vmem:[%s7 + $0x34] sm:$0xf]
  %v415 = vld [vmem:[%s7 + $0x38] sm:$0xf]
  %v416 = vld [vmem:[%s7 + $0x3c] sm:$0xf]
  %v417 = vld [vmem:[%s7 + $0x40] sm:$0xf]
  %v418 = vld [vmem:[%s7 + $0x44] sm:$0xf]
  %v419 = vld [vmem:[%s7 + $0x48] sm:$0xf]
  %v420 = vld [vmem:[%s7 + $0x4c] sm:$0xf]
  %v421 = vld [vmem:[%s7 + $0x50] sm:$0xf]
  %v422 = vld [vmem:[%s7 + $0x54] sm:$0xf]
  %v423 = vld [vmem:[%s7 + $0x58] sm:$0xf]
  %v424 = vld [vmem:[%s7 + $0x5c] sm:$0xf]
  %v425 = vld [vmem:[%s7 + $0x60] sm:$0xf]
  %v426 = vld [vmem:[%s7 + $0x64] sm:$0xf]
  %v427 = vld [vmem:[%s7 + $0x68] sm:$0xf]
  %v428 = vld [vmem:[%s7 + $0x6c] sm:$0xf]
  %v429 = vld [vmem:[%s7 + $0x70] sm:$0xf]
  %v430 = vld [vmem:[%s7 + $0x74] sm:$0xf]
  %v431 = vld [vmem:[%s7 + $0x78] sm:$0xf]
  %v432 = vld [vmem:[%s7 + $0x7c] sm:$0xf]
  %v433 = vsub.f32 %v336, -0.5
  %v434 = vsub.f32 %v337, -0.5
  %v435 = vmul.f32 %v433, %v433
  %v436 = vmul.f32 %v434, %v434
  %v437 = vsub.f32 0.0, %v435
  %v438 = vsub.f32 0.0, %v436
  %v439 = vmul.f32 %v437, 1.442695
  %v440 = vpow.pop %v439
  %v441 = vmul.f32 %v438, 1.442695
  %v442 = vpow.pop %v441
  %v443 = vpack.c.bf16 %v442, %v440
  %444 = vst.msk [vmem:[#allocation2 + $0x10] sm:$0xff] %vm92, %v443
  %v445 = vsub.f32 %v336, 0.5
  %v446 = vsub.f32 %v337, 0.5
  %v447 = vmul.f32 %v445, %v445
  %v448 = vmul.f32 %v446, %v446
  %v449 = vsub.f32 0.0, %v447
  %v450 = vsub.f32 0.0, %v448
  %v451 = vmul.f32 %v449, 1.442695
  %v452 = vpow.pop %v451
  %v453 = vmul.f32 %v450, 1.442695
  %v454 = vpow.pop %v453
  %v455 = vpack.c.bf16 %v454, %v452
  %457 = vrot.lane.b32.xlu0 %v455, 64
  %v458 = vpop.permute.xlu0 %457
  %460 = vst.msk [vmem:[#allocation2 + $0x10] sm:$0xff] %vm369, %v458
  %v461 = vsub.f32 %v336, 1.5
  %v462 = vsub.f32 %v337, 1.5
  %v463 = vmul.f32 %v461, %v461
  %v464 = vmul.f32 %v462, %v462
  %v465 = vsub.f32 0.0, %v463
  %v466 = vsub.f32 0.0, %v464
  %v467 = vmul.f32 %v465, 1.442695
  %v468 = vpow.pop %v467
  %v469 = vmul.f32 %v466, 1.442695
  %v470 = vpow.pop %v469
  %v471 = vpack.c.bf16 %v470, %v468
  %472 = vst.msk [vmem:[#allocation2 + $0x18] sm:$0xff] %vm92, %v471
  %v473 = vsub.f32 %v336, 2.5
  %v474 = vsub.f32 %v337, 2.5
  %v475 = vmul.f32 %v473, %v473
  %v476 = vmul.f32 %v474, %v474
  %v477 = vsub.f32 0.0, %v475
  %v478 = vsub.f32 0.0, %v476
  %v479 = vmul.f32 %v477, 1.442695
  %v480 = vpow.pop %v479
  %v481 = vmul.f32 %v478, 1.442695
  %v482 = vpow.pop %v481
  %v483 = vpack.c.bf16 %v482, %v480
  %485 = vrot.lane.b32.xlu0 %v483, 64
  %v486 = vpop.permute.xlu0 %485
  %488 = vst.msk [vmem:[#allocation2 + $0x18] sm:$0xff] %vm369, %v486
  %v489 = vsub.f32 %v336, 3.5
  %v490 = vsub.f32 %v337, 3.5
  %v491 = vmul.f32 %v489, %v489
  %v492 = vmul.f32 %v490, %v490
  %v493 = vsub.f32 0.0, %v491
  %v494 = vsub.f32 0.0, %v492
  %v495 = vmul.f32 %v493, 1.442695
  %v496 = vpow.pop %v495
  %v497 = vmul.f32 %v494, 1.442695
  %v498 = vpow.pop %v497
  %v499 = vpack.c.bf16 %v498, %v496
  %500 = vst.msk [vmem:[#allocation2 + $0x20] sm:$0xff] %vm92, %v499
  %v501 = vld [vmem:[#allocation2 + $0x10] sm:$0xff]
  %v502 = vld [vmem:[#allocation2 + $0x18] sm:$0xff]
  %v503 = vld [vmem:[#allocation2 + $0x20] sm:$0xff]
  %v504 = vld [vmem:[%s7 + $0x80] sm:$0xf]
  %v505 = vld [vmem:[%s7 + $0x84] sm:$0xf]
  %v506 = vld [vmem:[%s7 + $0x88] sm:$0xf]
  %v507 = vld [vmem:[%s7 + $0x8c] sm:$0xf]
  %v508 = vld [vmem:[%s7 + $0x90] sm:$0xf]
  %v509 = vld [vmem:[%s7 + $0x94] sm:$0xf]
  %v510 = vld [vmem:[%s7 + $0x98] sm:$0xf]
  %v511 = vld [vmem:[%s7 + $0x9c] sm:$0xf]
  %v512 = vld [vmem:[%s7 + $0xa0] sm:$0xf]
  %v513 = vld [vmem:[%s7 + $0xa4] sm:$0xf]
  %v514 = vld [vmem:[%s7 + $0xa8] sm:$0xf]
  %v515 = vld [vmem:[%s7 + $0xac] sm:$0xf]
  %v516 = vld [vmem:[%s7 + $0xb0] sm:$0xf]
  %v517 = vld [vmem:[%s7 + $0xb4] sm:$0xf]
  %v518 = vld [vmem:[%s7 + $0xb8] sm:$0xf]
  %v519 = vld [vmem:[%s7 + $0xbc] sm:$0xf]
  %v520 = vld [vmem:[%s7 + $0xc0] sm:$0xf]
  %v521 = vld [vmem:[%s7 + $0xc4] sm:$0xf]
  %v522 = vld [vmem:[%s7 + $0xc8] sm:$0xf]
  %v523 = vld [vmem:[%s7 + $0xcc] sm:$0xf]
  %v524 = vld [vmem:[%s7 + $0xd0] sm:$0xf]
  %v525 = vld [vmem:[%s7 + $0xd4] sm:$0xf]
  %v526 = vld [vmem:[%s7 + $0xd8] sm:$0xf]
  %v527 = vld [vmem:[%s7 + $0xdc] sm:$0xf]
  %v528 = vld [vmem:[%s7 + $0xe0] sm:$0xf]
  %v529 = vld [vmem:[%s7 + $0xe4] sm:$0xf]
  %v530 = vld [vmem:[%s7 + $0xe8] sm:$0xf]
  %v531 = vld [vmem:[%s7 + $0xec] sm:$0xf]
  %v532 = vld [vmem:[%s7 + $0xf0] sm:$0xf]
  %v533 = vld [vmem:[%s7 + $0xf4] sm:$0xf]
  %v534 = vld [vmem:[%s7 + $0xf8] sm:$0xf]
  %v535 = vld [vmem:[%s7 + $0xfc] sm:$0xf]
  %v536 = vld [vmem:[%s7 + $0x100] sm:$0xf]
  %v537 = vld [vmem:[%s7 + $0x104] sm:$0xf]
  %v538 = vld [vmem:[%s7 + $0x108] sm:$0xf]
  %v539 = vld [vmem:[%s7 + $0x10c] sm:$0xf]
  %v540 = vld [vmem:[%s7 + $0x110] sm:$0xf]
  %v541 = vld [vmem:[%s7 + $0x114] sm:$0xf]
  %v542 = vld [vmem:[%s7 + $0x118] sm:$0xf]
  %v543 = vld [vmem:[%s7 + $0x11c] sm:$0xf]
  %v584 = vunpack.c.l.b16 %v504
  %v585 = vunpack.c.l.b16 %v505
  %v586 = vunpack.c.l.b16 %v506
  %v587 = vunpack.c.l.b16 %v507
  %v588 = vunpack.c.l.b16 %v508
  %v589 = vunpack.c.l.b16 %v509
  %v590 = vunpack.c.l.b16 %v510
  %v591 = vunpack.c.l.b16 %v511
  %v592 = vunpack.c.l.b16 %v512
  %v593 = vunpack.c.l.b16 %v513
  %v594 = vunpack.c.l.b16 %v514
  %v595 = vunpack.c.l.b16 %v515
  %v596 = vunpack.c.l.b16 %v516
  %v597 = vunpack.c.l.b16 %v517
  %v598 = vunpack.c.l.b16 %v518
  %v599 = vunpack.c.l.b16 %v519
  %v600 = vunpack.c.l.b16 %v520
  %v601 = vunpack.c.l.b16 %v521
  %v602 = vunpack.c.l.b16 %v522
  %v603 = vunpack.c.l.b16 %v523
  %v604 = vunpack.c.l.b16 %v524
  %v605 = vunpack.c.l.b16 %v525
  %v606 = vunpack.c.l.b16 %v526
  %v607 = vunpack.c.l.b16 %v527
  %v608 = vunpack.c.l.b16 %v528
  %v609 = vunpack.c.l.b16 %v529
  %v610 = vunpack.c.l.b16 %v530
  %v611 = vunpack.c.l.b16 %v531
  %v612 = vunpack.c.l.b16 %v532
  %v613 = vunpack.c.l.b16 %v533
  %v614 = vunpack.c.l.b16 %v534
  %v615 = vunpack.c.l.b16 %v535
  %v616 = vunpack.c.l.b16 %v536
  %v617 = vunpack.c.l.b16 %v537
  %v618 = vunpack.c.l.b16 %v538
  %v619 = vunpack.c.l.b16 %v539
  %v620 = vunpack.c.l.b16 %v540
  %v621 = vunpack.c.l.b16 %v541
  %v622 = vunpack.c.l.b16 %v542
  %v623 = vunpack.c.l.b16 %v543
  %v624 = vpack.c.b16 %v585, %v584
  %v625 = vpack.c.b16 %v587, %v586
  %v626 = vpack.c.b16 %v589, %v588
  %v627 = vpack.c.b16 %v591, %v590
  %v628 = vpack.c.b16 %v593, %v592
  %v629 = vpack.c.b16 %v595, %v594
  %v630 = vpack.c.b16 %v597, %v596
  %v631 = vpack.c.b16 %v599, %v598
  %v632 = vpack.c.b16 %v601, %v600
  %v633 = vpack.c.b16 %v603, %v602
  %v634 = vpack.c.b16 %v605, %v604
  %v635 = vpack.c.b16 %v607, %v606
  %v636 = vpack.c.b16 %v609, %v608
  %v637 = vpack.c.b16 %v611, %v610
  %v638 = vpack.c.b16 %v613, %v612
  %v639 = vpack.c.b16 %v615, %v614
  %v640 = vpack.c.b16 %v617, %v616
  %v641 = vpack.c.b16 %v619, %v618
  %v642 = vpack.c.b16 %v621, %v620
  %v643 = vpack.c.b16 %v623, %v622
  %v665 = vsel %vm92, %v503, 0
  %667 = vmatprep.subr.bf16.mxu0 0
  %668 = vmatpush1.bf16.msra.mxu0 %v624
  %669 = vmatprep.subr.bf16.mxu0 0
  %670 = vmatpush1.bf16.msra.mxu0 %v625
  %671 = vmatprep.subr.bf16.mxu0 0
  %672 = vmatpush1.bf16.msra.mxu0 %v626
  %673 = vmatprep.subr.bf16.mxu0 0
  %674 = vmatpush1.bf16.msra.mxu0 %v627
  %675 = vmatprep.subr.bf16.mxu0 0
  %676 = vmatpush1.bf16.msra.mxu0 %v628
  %677 = vmatprep.subr.bf16.mxu0 0
  %678 = vmatpush1.bf16.msra.mxu0 %v629
  %679 = vmatprep.subr.bf16.mxu0 0
  %680 = vmatpush1.bf16.msra.mxu0 %v630
  %681 = vmatprep.subr.bf16.mxu0 0
  %682 = vmatpush1.bf16.msra.mxu0 %v631
  %683 = vmatprep.subr.bf16.mxu0 0
  %684 = vmatpush1.bf16.msra.mxu0 %v632
  %685 = vmatprep.subr.bf16.mxu0 0
  %686 = vmatpush1.bf16.msra.mxu0 %v633
  %687 = vmatprep.subr.bf16.mxu0 0
  %688 = vmatpush1.bf16.msra.mxu0 %v634
  %689 = vmatprep.subr.bf16.mxu0 0
  %690 = vmatpush1.bf16.msra.mxu0 %v635
  %691 = vmatprep.subr.bf16.mxu0 0
  %692 = vmatpush1.bf16.msra.mxu0 %v636
  %693 = vmatprep.subr.bf16.mxu0 0
  %694 = vmatpush1.bf16.msra.mxu0 %v637
  %695 = vmatprep.subr.bf16.mxu0 0
  %696 = vmatpush1.bf16.msra.mxu0 %v638
  %697 = vmatprep.subr.bf16.mxu0 0
  %698 = vmatpush1.bf16.msra.mxu0 %v639
  %699 = vmatprep.mubr.bf16.mxu0 %v502
  %700 = vmatmul.mubr.bf16.gmra.mrb[0].mxu0 %v501
  %v701 = vpop.f32.mrb[0].mxu0
  %v702 = vadd.f32 0.0, %v701
  %v703 = vpop.f32.mrb[0].mxu0
  %v704 = vpop.f32.mrb[0].mxu0
  %v705 = vadd.f32 0.0, %v704
  %v706 = vpop.f32.mrb[0].mxu0
  %707 = vdwg.mxu0
  %708 = vmatprep.subr.bf16.mxu0 0
  %709 = vmatpush1.bf16.msra.mxu0 %v640
  %710 = vmatprep.subr.bf16.mxu0 0
  %711 = vmatpush1.bf16.msra.mxu0 %v641
  %712 = vmatprep.subr.bf16.mxu0 0
  %713 = vmatpush1.bf16.msra.mxu0 %v642
  %714 = vmatprep.subr.bf16.mxu0 0
  %715 = vmatpush1.bf16.msra.mxu0 %v643
  %716 = vmatprep.subr.bf16.mxu0 0
  %717 = vmatpush1.bf16.msra.mxu0 0
  %718 = vmatprep.subr.bf16.mxu0 0
  %719 = vmatpush1.bf16.msra.mxu0 0
  %720 = vmatprep.subr.bf16.mxu0 0
  %721 = vmatpush1.bf16.msra.mxu0 0
  %722 = vmatprep.subr.bf16.mxu0 0
  %723 = vmatpush1.bf16.msra.mxu0 0
  %724 = vmatprep.subr.bf16.mxu0 0
  %725 = vmatpush1.bf16.msra.mxu0 0
  %726 = vmatprep.subr.bf16.mxu0 0
  %727 = vmatpush1.bf16.msra.mxu0 0
  %728 = vmatprep.subr.bf16.mxu0 0
  %729 = vmatpush1.bf16.msra.mxu0 0
  %730 = vmatprep.subr.bf16.mxu0 0
  %731 = vmatpush1.bf16.msra.mxu0 0
  %732 = vmatprep.subr.bf16.mxu0 0
  %733 = vmatpush1.bf16.msra.mxu0 0
  %734 = vmatprep.subr.bf16.mxu0 0
  %735 = vmatpush1.bf16.msra.mxu0 0
  %736 = vmatprep.subr.bf16.mxu0 0
  %737 = vmatpush1.bf16.msra.mxu0 0
  %738 = vmatprep.subr.bf16.mxu0 0
  %739 = vmatpush1.bf16.msra.mxu0 0
  %740 = vmatprep.mubr.bf16.mxu0 0
  %741 = vmatmul.mubr.bf16.gmra.mrb[0].mxu0 %v665
  %v742 = vpop.f32.mrb[0].mxu0
  %v743 = vadd.f32 %v702, %v742
  %v744 = vpop.f32.mrb[0].mxu0
  %v745 = vpop.f32.mrb[0].mxu0
  %v746 = vadd.f32 %v705, %v745
  %v747 = vpop.f32.mrb[0].mxu0
  %748 = vdwg.mxu0
  %v781 = vunpack.c.l.b16 %v401
  %v782 = vunpack.c.l.b16 %v402
  %v783 = vunpack.c.l.b16 %v403
  %v784 = vunpack.c.l.b16 %v404
  %v785 = vunpack.c.l.b16 %v405
  %v786 = vunpack.c.l.b16 %v406
  %v787 = vunpack.c.l.b16 %v407
  %v788 = vunpack.c.l.b16 %v408
  %v789 = vunpack.c.l.b16 %v409
  %v790 = vunpack.c.l.b16 %v410
  %v791 = vunpack.c.l.b16 %v411
  %v792 = vunpack.c.l.b16 %v412
  %v793 = vunpack.c.l.b16 %v413
  %v794 = vunpack.c.l.b16 %v414
  %v795 = vunpack.c.l.b16 %v415
  %v796 = vunpack.c.l.b16 %v416
  %v797 = vunpack.c.l.b16 %v417
  %v798 = vunpack.c.l.b16 %v418
  %v799 = vunpack.c.l.b16 %v419
  %v800 = vunpack.c.l.b16 %v420
  %v801 = vunpack.c.l.b16 %v421
  %v802 = vunpack.c.l.b16 %v422
  %v803 = vunpack.c.l.b16 %v423
  %v804 = vunpack.c.l.b16 %v424
  %v805 = vunpack.c.l.b16 %v425
  %v806 = vunpack.c.l.b16 %v426
  %v807 = vunpack.c.l.b16 %v427
  %v808 = vunpack.c.l.b16 %v428
  %v809 = vunpack.c.l.b16 %v429
  %v810 = vunpack.c.l.b16 %v430
  %v811 = vunpack.c.l.b16 %v431
  %v812 = vunpack.c.l.b16 %v432
  %v813 = vpack.c.b16 %v782, %v781
  %v814 = vpack.c.b16 %v784, %v783
  %v815 = vpack.c.b16 %v786, %v785
  %v816 = vpack.c.b16 %v788, %v787
  %v817 = vpack.c.b16 %v790, %v789
  %v818 = vpack.c.b16 %v792, %v791
  %v819 = vpack.c.b16 %v794, %v793
  %v820 = vpack.c.b16 %v796, %v795
  %v821 = vpack.c.b16 %v798, %v797
  %v822 = vpack.c.b16 %v800, %v799
  %v823 = vpack.c.b16 %v802, %v801
  %v824 = vpack.c.b16 %v804, %v803
  %v825 = vpack.c.b16 %v806, %v805
  %v826 = vpack.c.b16 %v808, %v807
  %v827 = vpack.c.b16 %v810, %v809
  %v828 = vpack.c.b16 %v812, %v811
  %845 = vmatprep.subr.bf16.mxu0 0
  %846 = vmatpush1.bf16.msra.mxu0 %v813
  %847 = vmatprep.subr.bf16.mxu0 0
  %848 = vmatpush1.bf16.msra.mxu0 %v814
  %849 = vmatprep.subr.bf16.mxu0 0
  %850 = vmatpush1.bf16.msra.mxu0 %v815
  %851 = vmatprep.subr.bf16.mxu0 0
  %852 = vmatpush1.bf16.msra.mxu0 %v816
  %853 = vmatprep.subr.bf16.mxu0 0
  %854 = vmatpush1.bf16.msra.mxu0 %v817
  %855 = vmatprep.subr.bf16.mxu0 0
  %856 = vmatpush1.bf16.msra.mxu0 %v818
  %857 = vmatprep.subr.bf16.mxu0 0
  %858 = vmatpush1.bf16.msra.mxu0 %v819
  %859 = vmatprep.subr.bf16.mxu0 0
  %860 = vmatpush1.bf16.msra.mxu0 %v820
  %861 = vmatprep.subr.bf16.mxu0 0
  %862 = vmatpush1.bf16.msra.mxu0 %v821
  %863 = vmatprep.subr.bf16.mxu0 0
  %864 = vmatpush1.bf16.msra.mxu0 %v822
  %865 = vmatprep.subr.bf16.mxu0 0
  %866 = vmatpush1.bf16.msra.mxu0 %v823
  %867 = vmatprep.subr.bf16.mxu0 0
  %868 = vmatpush1.bf16.msra.mxu0 %v824
  %869 = vmatprep.subr.bf16.mxu0 0
  %870 = vmatpush1.bf16.msra.mxu0 %v825
  %871 = vmatprep.subr.bf16.mxu0 0
  %872 = vmatpush1.bf16.msra.mxu0 %v826
  %873 = vmatprep.subr.bf16.mxu0 0
  %874 = vmatpush1.bf16.msra.mxu0 %v827
  %875 = vmatprep.subr.bf16.mxu0 0
  %876 = vmatpush1.bf16.msra.mxu0 %v828
  %877 = vmatprep.mubr.bf16.mxu0 %v400
  %878 = vmatmul.mubr.bf16.gmra.mrb[0].mxu0 %v399
  %v879 = vpop.f32.mrb[0].mxu0
  %v880 = vadd.f32 %v743, %v879
  %v881 = vpop.f32.mrb[0].mxu0
  %v882 = vpop.f32.mrb[0].mxu0
  %v883 = vadd.f32 %v746, %v882
  %v884 = vpop.f32.mrb[0].mxu0
  %885 = vdwg.mxu0
  %v886 = vpack.c.bf16 %v883, %v880
  %v887 = vld [vmem:[%s8] sm:$0xf]
  %v888 = vld [vmem:[%s8 + $0x4] sm:$0xf]
  %v889 = vld [vmem:[%s8 + $0x8] sm:$0xf]
  %v890 = vld [vmem:[%s8 + $0xc] sm:$0xf]
  %v891 = vld [vmem:[%s8 + $0x10] sm:$0xf]
  %v892 = vld [vmem:[%s8 + $0x14] sm:$0xf]
  %v893 = vld [vmem:[%s8 + $0x18] sm:$0xf]
  %v894 = vld [vmem:[%s8 + $0x1c] sm:$0xf]
  %v896 = vlaneseq
  %v897 = vshrl.u32 %v896, 7
  %v898 = vsub.s32 0, %v897
  %v899 = vrot.slane %v45, %v898
  %v909 = vunpack.c.l.b16 %v887
  %v910 = vunpack.c.l.b16 %v888
  %v911 = vunpack.c.l.b16 %v889
  %v912 = vunpack.c.l.b16 %v890
  %v913 = vunpack.c.l.b16 %v891
  %v914 = vunpack.c.l.b16 %v892
  %v915 = vunpack.c.l.b16 %v893
  %v916 = vunpack.c.l.b16 %v894
  %v917 = vpack.c.b16 %v910, %v909
  %v918 = vpack.c.b16 %v912, %v911
  %v919 = vpack.c.b16 %v914, %v913
  %v920 = vpack.c.b16 %v916, %v915
  %v926 = vsel %vm92, %v886, 0
  %928 = vmatprep.subr.bf16.mxu0 0
  %929 = vmatpush1.bf16.msra.mxu0 %v917
  %930 = vmatprep.subr.bf16.mxu0 0
  %931 = vmatpush1.bf16.msra.mxu0 %v918
  %932 = vmatprep.subr.bf16.mxu0 0
  %933 = vmatpush1.bf16.msra.mxu0 %v919
  %934 = vmatprep.subr.bf16.mxu0 0
  %935 = vmatpush1.bf16.msra.mxu0 %v920
  %936 = vmatprep.subr.bf16.mxu0 0
  %937 = vmatpush1.bf16.msra.mxu0 0
  %938 = vmatprep.subr.bf16.mxu0 0
  %939 = vmatpush1.bf16.msra.mxu0 0
  %940 = vmatprep.subr.bf16.mxu0 0
  %941 = vmatpush1.bf16.msra.mxu0 0
  %942 = vmatprep.subr.bf16.mxu0 0
  %943 = vmatpush1.bf16.msra.mxu0 0
  %944 = vmatprep.subr.bf16.mxu0 0
  %945 = vmatpush1.bf16.msra.mxu0 0
  %946 = vmatprep.subr.bf16.mxu0 0
  %947 = vmatpush1.bf16.msra.mxu0 0
  %948 = vmatprep.subr.bf16.mxu0 0
  %949 = vmatpush1.bf16.msra.mxu0 0
  %950 = vmatprep.subr.bf16.mxu0 0
  %951 = vmatpush1.bf16.msra.mxu0 0
  %952 = vmatprep.subr.bf16.mxu0 0
  %953 = vmatpush1.bf16.msra.mxu0 0
  %954 = vmatprep.subr.bf16.mxu0 0
  %955 = vmatpush1.bf16.msra.mxu0 0
  %956 = vmatprep.subr.bf16.mxu0 0
  %957 = vmatpush1.bf16.msra.mxu0 0
  %958 = vmatprep.subr.bf16.mxu0 0
  %959 = vmatpush1.bf16.msra.mxu0 0
  %960 = vmatprep.mubr.bf16.mxu0 0
  %961 = vmatmul.mubr.bf16.gmra.mrb[0].mxu0 %v926
  %v962 = vpop.f32.mrb[0].mxu0
  %v963 = vadd.f32 %v899, %v962
  %v964 = vpop.f32.mrb[0].mxu0
  %v965 = vpop.f32.mrb[0].mxu0
  %v966 = vadd.f32 %v899, %v965
  %v967 = vpop.f32.mrb[0].mxu0
  %968 = vdwg.mxu0
  %v969 = vmax.f32 %v963, 0.0
  %v970 = vmax.f32 %v966, 0.0
  %v971 = vld [vmem:[%s10] sm:$0xff]
  %v972 = vld [vmem:[%s10 + $0x8] sm:$0xff]
  %v973 = vld [vmem:[%s10 + $0x10] sm:$0xff]
  %v974 = vld [vmem:[%s10 + $0x18] sm:$0xff]
  %v976 = vlaneseq
  %v977 = vshrl.u32 %v976, 7
  %v978 = vsub.s32 0, %v977
  %v979 = vrot.slane %v46, %v978
  %vm981 = vcmask 261120
  %v983 = vsel %vm981, %v969, 0
  %v986 = vsel %vm981, %v970, 0
  %988 = vmatprep.subr.mxu0 0.0
  %989 = vmatpush1.msra.mxu0 %v971
  %990 = vmatprep.subr.mxu0 0.0
  %991 = vmatpush1.msra.mxu0 %v972
  %992 = vmatprep.subr.mxu0 0.0
  %993 = vmatpush1.msra.mxu0 %v973
  %994 = vmatprep.subr.mxu0 0.0
  %995 = vmatpush1.msra.mxu0 %v974
  %996 = vmatprep.subr.mxu0 0.0
  %997 = vmatpush1.msra.mxu0 0.0
  %998 = vmatprep.subr.mxu0 0.0
  %999 = vmatpush1.msra.mxu0 0.0
  %1000 = vmatprep.subr.mxu0 0.0
  %1001 = vmatpush1.msra.mxu0 0.0
  %1002 = vmatprep.subr.mxu0 0.0
  %1003 = vmatpush1.msra.mxu0 0.0
  %1004 = vmatprep.subr.mxu0 0.0
  %1005 = vmatpush1.msra.mxu0 0.0
  %1006 = vmatprep.subr.mxu0 0.0
  %1007 = vmatpush1.msra.mxu0 0.0
  %1008 = vmatprep.subr.mxu0 0.0
  %1009 = vmatpush1.msra.mxu0 0.0
  %1010 = vmatprep.subr.mxu0 0.0
  %1011 = vmatpush1.msra.mxu0 0.0
  %1012 = vmatprep.subr.mxu0 0.0
  %1013 = vmatpush1.msra.mxu0 0.0
  %1014 = vmatprep.subr.mxu0 0.0
  %1015 = vmatpush1.msra.mxu0 0.0
  %1016 = vmatprep.subr.mxu0 0.0
  %1017 = vmatpush1.msra.mxu0 0.0
  %1018 = vmatprep.subr.mxu0 0.0
  %1019 = vmatpush1.msra.mxu0 0.0
  %1020 = vmatprep.subr.mxu0 0.0
  %1021 = vmatpush1.msra.mxu0 0.0
  %1022 = vmatprep.subr.mxu0 0.0
  %1023 = vmatpush1.msra.mxu0 0.0
  %1024 = vmatprep.subr.mxu0 0.0
  %1025 = vmatpush1.msra.mxu0 0.0
  %1026 = vmatprep.subr.mxu0 0.0
  %1027 = vmatpush1.msra.mxu0 0.0
  %1028 = vmatprep.subr.mxu0 0.0
  %1029 = vmatpush1.msra.mxu0 0.0
  %1030 = vmatprep.subr.mxu0 0.0
  %1031 = vmatpush1.msra.mxu0 0.0
  %1032 = vmatprep.subr.mxu0 0.0
  %1033 = vmatpush1.msra.mxu0 0.0
  %1034 = vmatprep.subr.mxu0 0.0
  %1035 = vmatpush1.msra.mxu0 0.0
  %1036 = vmatprep.subr.mxu0 0.0
  %1037 = vmatpush1.msra.mxu0 0.0
  %1038 = vmatprep.subr.mxu0 0.0
  %1039 = vmatpush1.msra.mxu0 0.0
  %1040 = vmatprep.subr.mxu0 0.0
  %1041 = vmatpush1.msra.mxu0 0.0
  %1042 = vmatprep.subr.mxu0 0.0
  %1043 = vmatpush1.msra.mxu0 0.0
  %1044 = vmatprep.subr.mxu0 0.0
  %1045 = vmatpush1.msra.mxu0 0.0
  %1046 = vmatprep.subr.mxu0 0.0
  %1047 = vmatpush1.msra.mxu0 0.0
  %1048 = vmatprep.subr.mxu0 0.0
  %1049 = vmatpush1.msra.mxu0 0.0
  %1050 = vmatprep.subr.mxu0 0.0
  %1051 = vmatpush1.msra.mxu0 0.0
  %1052 = vmatprep.mubr.f32.mxu0 0.0
  %1053 = vmatmul.mubr.f32.gmra.mrb[0].mxu0 %v983
  %v1054 = vpop.f32.mrb[0].mxu0
  %v1055 = vadd.f32 %v979, %v1054
  %v1056 = vpop.f32.mrb[0].mxu0
  %1057 = vmatprep.mubr.f32.mxu0 0.0
  %1058 = vmatmul.mubr.f32.gmra.mrb[0].mxu0 %v986
  %v1059 = vpop.f32.mrb[0].mxu0
  %v1060 = vadd.f32 %v979, %v1059
  %v1061 = vpop.f32.mrb[0].mxu0
  %1062 = vdwg.mxu0
  %1063 = vst [vmem:[%s12] sm:$0xff] %v1055
  %1064 = vst [vmem:[%s12 + $0x8] sm:$0xff] %v1060
  // Predicated region
  $region50: #{pkan_forward.1} parent=0 // pred_check
    _
  $region51: #{pkan_forward.1} parent=0 // pred_check_branch
    %1066 = sbr.rel (0) target = $region53
  $region52: #{pkan_forward.1} parent=0 // pred_region
    _
  $region53: #{pkan_forward.1} parent=0 // pred_fallthru
    _
  // Predicated region
  $region54: #{pkan_forward.1} parent=0 // pred_check
    _
  $region55: #{pkan_forward.1} parent=0 // pred_check_branch
    %1068 = sbr.rel (0) target = $region57
  $region56: #{pkan_forward.1} parent=0 // pred_region
    _
  $region57: #{pkan_forward.1} parent=0 // pred_fallthru
    _

</llo_original>
